<compile_context>
chip_gen: v7x
topology: tpu7x:2x2x1
jax: 0.10.0
libtpu: 0.0.40
codegen_flags: <defaults>
</compile_context>

<pallas_src>
import functools
import math

import jax
import jax.numpy as jnp
from jax.experimental import pallas as pl
from jax.experimental.pallas import tpu as pltpu


# ----------------------------------------------------------------------------
# Pallas kernels
# ----------------------------------------------------------------------------
def _matmul_bias_kernel(act, x_ref, w_ref, b_ref, o_ref):
    y = jnp.dot(x_ref[...], w_ref[...], preferred_element_type=jnp.float32)
    y = y + b_ref[...]                       # (M, N) + (1, N)
    if act == "relu":
        y = jnp.maximum(y, 0.0)
    o_ref[...] = y.astype(o_ref.dtype)


def linear(x, w, b, act="none"):
    """x: (M, K) @ w: (K, N) + b: (N,), optional fused activation (single block)."""
    M, K = x.shape
    N = w.shape[1]
    return pl.pallas_call(
        functools.partial(_matmul_bias_kernel, act),
        out_shape=jax.ShapeDtypeStruct((M, N), x.dtype),
    )(x, w, b.reshape(1, N))


def _fused_layer_kernel(nhead, scale, eps,
                        q_ref, kv_ref, wq_ref, bq_ref, wkv_ref, bkv_ref,
                        wo_ref, bo_ref, ln1g_ref, ln1b_ref,
                        w1_ref, b1_ref, w2_ref, b2_ref,
                        ln2g_ref, ln2b_ref, o_ref):
    """One full post-norm transformer block for one batch element, fully in VMEM."""
    E = wq_ref.shape[0]
    Dh = E // nhead

    def ln(y, g, b):
        mu = jnp.mean(y, axis=-1, keepdims=True)
        var = jnp.mean((y - mu) ** 2, axis=-1, keepdims=True)
        return (y - mu) * jax.lax.rsqrt(var + eps) * g + b

    x = q_ref[0].astype(jnp.float32)        # (Tq, E)
    mem = kv_ref[0].astype(jnp.float32)     # (Tk, E)

    # Q projection on the query stream, concatenated K|V projection on memory.
    q = jnp.dot(x, wq_ref[...], preferred_element_type=jnp.float32) + bq_ref[...]
    kvp = jnp.dot(mem, wkv_ref[...], preferred_element_type=jnp.float32) + bkv_ref[...]
    k = kvp[:, :E]
    v = kvp[:, E:]

    # Per-head attention; heads stay in VMEM, merged straight into the out-proj.
    attn = None
    for h in range(nhead):
        sl = slice(h * Dh, (h + 1) * Dh)
        qh, kh, vh = q[:, sl], k[:, sl], v[:, sl]
        s = jax.lax.dot_general(qh, kh, (((1,), (1,)), ((), ())),
                                preferred_element_type=jnp.float32) * scale
        s = s - jnp.max(s, axis=-1, keepdims=True)
        p = jnp.exp(s)
        p = p * pl.reciprocal(jnp.sum(p, axis=-1, keepdims=True), approx=True)
        oh = jnp.dot(p, vh, preferred_element_type=jnp.float32)          # (Tq, Dh)
        contrib = jnp.dot(oh, wo_ref[sl, :], preferred_element_type=jnp.float32)
        attn = contrib if attn is None else attn + contrib
    a = attn + bo_ref[...]

    # residual + LayerNorm 1
    y = ln(x + a, ln1g_ref[...], ln1b_ref[...])

    # ReLU FFN (dropout treated as eval / identity)
    h1 = jnp.maximum(
        jnp.dot(y, w1_ref[...], preferred_element_type=jnp.float32) + b1_ref[...], 0.0)
    h2 = jnp.dot(h1, w2_ref[...], preferred_element_type=jnp.float32) + b2_ref[...]

    # residual + LayerNorm 2
    z = ln(y + h2, ln2g_ref[...], ln2b_ref[...])
    o_ref[0] = z.astype(o_ref.dtype)


def fused_transformer_layer(q_in, kv, p, nhead, eps=1e-5):
    """Post-norm (attention + FFN) block; self-attn when kv is q_in, cross otherwise.
    Single pallas_call per layer, grid over batch ("parallel" for v7x megacore)."""
    B, Tq, E = q_in.shape
    Tk = kv.shape[1]
    Fd = p["w1"].shape[1]
    scale = 1.0 / math.sqrt(E // nhead)

    kernel = functools.partial(_fused_layer_kernel, nhead, scale, eps)
    return pl.pallas_call(
        kernel,
        out_shape=jax.ShapeDtypeStruct((B, Tq, E), q_in.dtype),
        grid=(B,),
        in_specs=[
            pl.BlockSpec((1, Tq, E), lambda b: (b, 0, 0)),      # q stream
            pl.BlockSpec((1, Tk, E), lambda b: (b, 0, 0)),      # memory / kv
            pl.BlockSpec((E, E), lambda b: (0, 0)),             # wq
            pl.BlockSpec((1, E), lambda b: (0, 0)),             # bq
            pl.BlockSpec((E, 2 * E), lambda b: (0, 0)),         # wkv (K|V concat)
            pl.BlockSpec((1, 2 * E), lambda b: (0, 0)),         # bkv
            pl.BlockSpec((E, E), lambda b: (0, 0)),             # wo
            pl.BlockSpec((1, E), lambda b: (0, 0)),             # bo
            pl.BlockSpec((1, E), lambda b: (0, 0)),             # ln1 gamma
            pl.BlockSpec((1, E), lambda b: (0, 0)),             # ln1 beta
            pl.BlockSpec((E, Fd), lambda b: (0, 0)),            # w1
            pl.BlockSpec((1, Fd), lambda b: (0, 0)),            # b1
            pl.BlockSpec((Fd, E), lambda b: (0, 0)),            # w2
            pl.BlockSpec((1, E), lambda b: (0, 0)),             # b2
            pl.BlockSpec((1, E), lambda b: (0, 0)),             # ln2 gamma
            pl.BlockSpec((1, E), lambda b: (0, 0)),             # ln2 beta
        ],
        out_specs=pl.BlockSpec((1, Tq, E), lambda b: (b, 0, 0)),
        compiler_params=pltpu.CompilerParams(dimension_semantics=("parallel",)),
    )(q_in, kv,
      p["wq"], p["bq"].reshape(1, E),
      p["wkv"], p["bkv"].reshape(1, 2 * E),
      p["wo"], p["bo"].reshape(1, E),
      p["ln1_g"].reshape(1, E), p["ln1_b"].reshape(1, E),
      p["w1"], p["b1"].reshape(1, Fd),
      p["w2"], p["b2"].reshape(1, E),
      p["ln2_g"].reshape(1, E), p["ln2_b"].reshape(1, E))


def _head_loss_kernel(x_ref, w_ref, b_ref, tgt_ref, um_ref, o_ref):
    """Prediction head + unmask-chunk zeroing + MSE sum, fused; writes one scalar."""
    pred = jnp.dot(x_ref[...].astype(jnp.float32), w_ref[...],
                   preferred_element_type=jnp.float32) + b_ref[...]
    um = um_ref[...].astype(jnp.float32)
    d = (pred - tgt_ref[...].astype(jnp.float32)) * um
    o_ref[0, 0] = jnp.sum(d * d)


def head_and_loss(dec, head_w, head_b, target, unmask_mult):
    B, T, E = dec.shape
    C = head_w.shape[1]
    x2 = dec.reshape(B * T, E)
    tgt2 = target.reshape(B * T, C)
    um2 = jnp.broadcast_to(unmask_mult[None], (B, T, C)).reshape(B * T, C)
    s = pl.pallas_call(
        _head_loss_kernel,
        out_shape=jax.ShapeDtypeStruct((1, 1), jnp.float32),
        out_specs=pl.BlockSpec(memory_space=pltpu.MemorySpace.SMEM),
    )(x2, head_w, head_b.reshape(1, C), tgt2, um2)
    return s[0, 0] / (B * T * C)


# ----------------------------------------------------------------------------
# Model pieces (glue + kernels)
# ----------------------------------------------------------------------------
def conv1d_subsample(x_btc, w1, b1, w2, b2):
    """Two Conv1d(k=3, stride=2) + ReLU layers, channels-last throughout.
    Static strided slices (no gather, no NCL transposes) feed one fused
    matmul+bias+ReLU Pallas call per conv.  Output == subsample(x).permute(0,2,1)."""

    def conv(x_blc, w, b):  # w: (Cout, Cin, k)
        Bn, L, Cin = x_blc.shape
        Cout, _, k = w.shape
        Lout = (L - k) // 2 + 1
        taps = [x_blc[:, i:i + 2 * Lout - 1:2, :] for i in range(k)]   # k x (B, Lout, Cin)
        patches = jnp.concatenate(taps, axis=-1).reshape(Bn * Lout, Cin * k)
        wm = jnp.transpose(w, (2, 1, 0)).reshape(k * Cin, Cout)        # rows: tap*Cin+cin
        y = linear(patches, wm, b, act="relu")
        return y.reshape(Bn, Lout, Cout)

    h = conv(x_btc, w1, b1)                                            # (B, L1, emb)
    h = conv(h, w2, b2)                                                # (B, L2, emb)
    return h


def positional_encoding(T, d):
    pos = jnp.arange(T, dtype=jnp.float32)[:, None]
    div = jnp.exp(jnp.arange(0, d, 2, dtype=jnp.float32) * (-math.log(10000.0) / d))
    pe = jnp.zeros((T, d), jnp.float32)
    pe = pe.at[:, 0::2].set(jnp.sin(pos * div))
    pe = pe.at[:, 1::2].set(jnp.cos(pos * div))
    return pe


def encoder_layer(x, p, nhead):
    # nn.TransformerEncoderLayer(batch_first=True) defaults: post-norm, ReLU FFN.
    return fused_transformer_layer(x, x, p, nhead)


def cross_attn_layer_fwd(q_in, memory, p, nhead):
    # TODO(synk): `cross_attn_layer` is not defined in the reference source;
    # implemented as a standard post-norm cross-attention + FFN transformer block.
    return fused_transformer_layer(q_in, memory, p, nhead)


def make_chunk_masks(key, T, C, chunk_size, chunk_step, mask_prob):
    """Reproduces masking()/loss_fn() chunk bookkeeping as multiplicative masks."""
    n_chunks = T // chunk_size // chunk_step
    u = jax.random.uniform(key, (C, n_chunks))          # prob_mask_like per channel
    chunk_masked = u < mask_prob
    stride = chunk_step * chunk_size
    pos = jnp.arange(T)
    cidx = pos // stride
    in_chunk = (pos % stride < chunk_size) & (cidx < n_chunks)
    cidx = jnp.clip(cidx, 0, n_chunks - 1)
    masked_here = chunk_masked[:, cidx].T & in_chunk[:, None]        # (T, C)
    unmasked_here = (~chunk_masked[:, cidx].T) & in_chunk[:, None]   # (T, C)
    masked_mult = jnp.where(masked_here, 0.0, 1.0).astype(jnp.float32)
    unmask_mult = jnp.where(unmasked_here, 0.0, 1.0).astype(jnp.float32)
    return masked_mult, unmask_mult


def mlm_forward(x, params, mask_key, *, chunk_size, chunk_step, mask_prob, nhead):
    B, T, C = x.shape
    emb = params["conv1_w"].shape[0]

    # masking(): zero randomly selected time chunks per channel (Z/N/E).
    masked_mult, unmask_mult = make_chunk_masks(
        mask_key, T, C, chunk_size, chunk_step, mask_prob)
    masked_x = x * masked_mult[None]

    # subsample(...).permute(0, 2, 1)
    h = conv1d_subsample(masked_x, params["conv1_w"], params["conv1_b"],
                         params["conv2_w"], params["conv2_b"])       # (B, T', emb)

    # self.model(masked_x.clone().detach())
    out = jax.lax.stop_gradient(h)
    for lp in params["enc"]:
        out = encoder_layer(out, lp, nhead)

    # pos_emb(x).unsqueeze(0).repeat(B, 1, 1)
    pos = jnp.broadcast_to(positional_encoding(T, emb)[None], (B, T, emb))

    dec = pos
    for lp in params["dec"]:
        dec = cross_attn_layer_fwd(dec, out, lp, nhead)

    # prediction_head + loss_fn(): zero the UNmasked chunks in both prediction
    # and (already masked) target, then mean-squared error over everything.
    return head_and_loss(dec, params["head_w"], params["head_b"],
                         masked_x, unmask_mult)


# ----------------------------------------------------------------------------
# Deterministic parameter initialization
# ----------------------------------------------------------------------------
def init_params(key, *, d_model, emb_dim, d_ffn, n_layers, dec_layers):
    keys = iter(jax.random.split(key, 256))

    def dense(shape):
        return jax.random.normal(next(keys), shape, jnp.float32) / jnp.sqrt(shape[0])

    def zeros(shape):
        return jnp.zeros(shape, jnp.float32)

    def ones(shape):
        return jnp.ones(shape, jnp.float32)

    def attn_block():
        return dict(
            wq=dense((emb_dim, emb_dim)), bq=zeros((emb_dim,)),
            wkv=dense((emb_dim, 2 * emb_dim)), bkv=zeros((2 * emb_dim,)),
            wo=dense((emb_dim, emb_dim)), bo=zeros((emb_dim,)),
            ln1_g=ones((emb_dim,)), ln1_b=zeros((emb_dim,)),
            w1=dense((emb_dim, d_ffn)), b1=zeros((d_ffn,)),
            w2=dense((d_ffn, emb_dim)), b2=zeros((emb_dim,)),
            ln2_g=ones((emb_dim,)), ln2_b=zeros((emb_dim,)),
        )

    params = {
        "conv1_w": jax.random.normal(next(keys), (emb_dim, d_model, 3),
                                     jnp.float32) / math.sqrt(d_model * 3),
        "conv1_b": zeros((emb_dim,)),
        "conv2_w": jax.random.normal(next(keys), (emb_dim, emb_dim, 3),
                                     jnp.float32) / math.sqrt(emb_dim * 3),
        "conv2_b": zeros((emb_dim,)),
        "enc": [attn_block() for _ in range(n_layers)],
        "dec": [attn_block() for _ in range(dec_layers)],
        "head_w": dense((emb_dim, d_model)),
        "head_b": zeros((d_model,)),
    }
    return params


# ----------------------------------------------------------------------------
if __name__ == "__main__":
    # MLM(chunk_size=8, chunk_step=1, mask_prob=0.5, 'transformer',
    #     d_model=3, nhead=4, d_ffn=64, n_layers=2, emb_dim=32)
    B, T, C = 2, 64, 3
    chunk_size, chunk_step, mask_prob = 8, 1, 0.5
    emb_dim, nhead, d_ffn, n_layers, dec_layers = 32, 4, 64, 2, 4

    root = jax.random.PRNGKey(0)
    k_x, k_p, k_m = jax.random.split(root, 3)
    x = jax.random.normal(k_x, (B, T, C), jnp.float32)
    params = init_params(k_p, d_model=C, emb_dim=emb_dim, d_ffn=d_ffn,
                         n_layers=n_layers, dec_layers=dec_layers)

    loss = mlm_forward(x, params, k_m, chunk_size=chunk_size,
                       chunk_step=chunk_step, mask_prob=mask_prob, nhead=nhead)
    jax.block_until_ready(loss)
    print("KERNEL_OK")
</pallas_src>

<mosaic_0001>
module attributes {stable_mosaic.version = 11 : i64} {
  func.func @_matmul_bias_kernel(%arg0: memref<62x9xf32, #tpu.memory_space<vmem>>, %arg1: memref<9x32xf32, #tpu.memory_space<vmem>>, %arg2: memref<1x32xf32, #tpu.memory_space<vmem>>, %arg3: memref<62x32xf32, #tpu.memory_space<vmem>>) attributes {dimension_semantics = [], scalar_prefetch = 0 : i64, scratch_operands = 0 : i64, tpu.core_type = #tpu.core_type<tc>} {
    %c0 = arith.constant 0 : index
    %c0_0 = arith.constant 0 : index
    %0 = vector.load %arg0[%c0, %c0_0] : memref<62x9xf32, #tpu.memory_space<vmem>>, vector<62x9xf32>
    %c0_1 = arith.constant 0 : index
    %c0_2 = arith.constant 0 : index
    %1 = vector.load %arg1[%c0_1, %c0_2] : memref<9x32xf32, #tpu.memory_space<vmem>>, vector<9x32xf32>
    %cst = arith.constant dense<0.000000e+00> : vector<62x32xf32>
    %2 = tpu.matmul %0, %1, %cst {dimension_numbers = #tpu.dot_dimension_numbers<[1], [0], [0], [1], [0, 0, 1, 1], [], []>} : vector<62x9xf32>, vector<9x32xf32>, vector<62x32xf32> -> vector<62x32xf32>
    %c0_3 = arith.constant 0 : index
    %c0_4 = arith.constant 0 : index
    %3 = vector.load %arg2[%c0_3, %c0_4] : memref<1x32xf32, #tpu.memory_space<vmem>>, vector<1x32xf32>
    %4 = vector.broadcast %3 : vector<1x32xf32> to vector<62x32xf32>
    %5 = arith.addf %2, %4 : vector<62x32xf32>
    %cst_5 = arith.constant 0.000000e+00 : f32
    %6 = vector.broadcast %cst_5 : f32 to vector<62x32xf32>
    %7 = arith.maximumf %5, %6 : vector<62x32xf32>
    %c0_6 = arith.constant 0 : index
    %c0_7 = arith.constant 0 : index
    %8 = vector.load %arg3[%c0_6, %c0_7] : memref<62x32xf32, #tpu.memory_space<vmem>>, vector<62x32xf32>
    tpu.vector_store %arg3[%c0_6, %c0_7], %7 {strides = array<i32>} : memref<62x32xf32, #tpu.memory_space<vmem>>, vector<62x32xf32>,
    return
  }
}

</mosaic_0001>

<llo_original>
// kernel: tpu_custom_call.1
$region0: #{tpu_custom_call.1}
  #allocation0 [shape = 'u32[]', space=smem, size = 0x4, offset = 0x4, fixed_abs, tag = 'smem constant byte address 0x4 - core index']
  #allocation1 [shape = 'u32[144,128]{1,0:T(1,128)}', space=vmem, size = 0x12000, scoped, tag = 'internal scratch']
  %s0 = inlined_call_operand.vmem [shape: f32[62,9], index: 0, kind: input, shape index: {}]
  %s1 = inlined_call_operand.vmem [shape: f32[9,32], index: 1, kind: input, shape index: {}]
  %s2 = inlined_call_operand.vmem [shape: f32[1,32], index: 2, kind: input, shape index: {}]
  %s3 = inlined_call_operand.vmem [shape: f32[62,32], index: 3, kind: output, shape index: {}]
  %s4 = sld [smem:[#allocation0]]
  $region22: #{tpu_custom_call.1} parent=0
    _
  %s6 = ssub.s32 1, %s4
  %s7 = scalar_select 0, %s6, %s4
  // Predicated region
  $region2: #{tpu_custom_call.1} parent=0 // pred_check
    _
  $region3: #{tpu_custom_call.1} parent=0 // pred_check_branch
    %9 = sbr.rel (0) target = $region5
  $region4: #{tpu_custom_call.1} parent=0 // pred_region
    _
  $region5: #{tpu_custom_call.1} parent=0 // pred_fallthru
    _
  // Predicated region
  $region6: #{tpu_custom_call.1} parent=0 // pred_check
    _
  $region7: #{tpu_custom_call.1} parent=0 // pred_check_branch
    %11 = sbr.rel (0) target = $region9
  $region8: #{tpu_custom_call.1} parent=0 // pred_region
    _
  $region9: #{tpu_custom_call.1} parent=0 // pred_fallthru
    _
  // Predicated region
  $region10: #{tpu_custom_call.1} parent=0 // pred_check
    _
  $region11: #{tpu_custom_call.1} parent=0 // pred_check_branch
    %13 = sbr.rel (0) target = $region13
  $region12: #{tpu_custom_call.1} parent=0 // pred_region
    _
  $region13: #{tpu_custom_call.1} parent=0 // pred_fallthru
    _
  %v14 = vld [vmem:[%s0] sm:$0xff]
  %v15 = vld [vmem:[%s0 + $0x8] sm:$0xff]
  %v16 = vld [vmem:[%s0 + $0x10] sm:$0xff]
  %v17 = vld [vmem:[%s0 + $0x18] sm:$0xff]
  %v18 = vld [vmem:[%s0 + $0x20] sm:$0xff]
  %v19 = vld [vmem:[%s0 + $0x28] sm:$0xff]
  %v20 = vld [vmem:[%s0 + $0x30] sm:$0xff]
  %v21 = vld [vmem:[%s0 + $0x38] sm:$0x3f]
  %v22 = vld [vmem:[%s1] sm:$0xff]
  %v23 = vld [vmem:[%s1 + $0x8] sm:$0x1]
  %v24 = vld [vmem:[%s2] sm:$0x1]
  %v26 = vlaneseq
  %v27 = vshrl.u32 %v26, 7
  %v28 = vsub.s32 0, %v27
  %v29 = vrot.slane %v24, %v28
  %vm31 = vcmask 72704
  %v33 = vsel %vm31, %v14, 0
  %v36 = vsel %vm31, %v15, 0
  %v39 = vsel %vm31, %v16, 0
  %v42 = vsel %vm31, %v17, 0
  %v45 = vsel %vm31, %v18, 0
  %v48 = vsel %vm31, %v19, 0
  %v51 = vsel %vm31, %v20, 0
  %v54 = vsel %vm31, %v21, 0
  %vm56 = vcmask 1040384
  %v58 = vsel %vm56, %v23, 0
  %60 = vmatprep.subr.mxu0 0.0
  %61 = vmatpush1.msra.mxu0 %v22
  %62 = vmatprep.subr.mxu0 0.0
  %63 = vmatpush1.msra.mxu0 %v58
  %64 = vmatprep.subr.mxu0 0.0
  %65 = vmatpush1.msra.mxu0 0.0
  %66 = vmatprep.subr.mxu0 0.0
  %67 = vmatpush1.msra.mxu0 0.0
  %68 = vmatprep.subr.mxu0 0.0
  %69 = vmatpush1.msra.mxu0 0.0
  %70 = vmatprep.subr.mxu0 0.0
  %71 = vmatpush1.msra.mxu0 0.0
  %72 = vmatprep.subr.mxu0 0.0
  %73 = vmatpush1.msra.mxu0 0.0
  %74 = vmatprep.subr.mxu0 0.0
  %75 = vmatpush1.msra.mxu0 0.0
  %76 = vmatprep.subr.mxu0 0.0
  %77 = vmatpush1.msra.mxu0 0.0
  %78 = vmatprep.subr.mxu0 0.0
  %79 = vmatpush1.msra.mxu0 0.0
  %80 = vmatprep.subr.mxu0 0.0
  %81 = vmatpush1.msra.mxu0 0.0
  %82 = vmatprep.subr.mxu0 0.0
  %83 = vmatpush1.msra.mxu0 0.0
  %84 = vmatprep.subr.mxu0 0.0
  %85 = vmatpush1.msra.mxu0 0.0
  %86 = vmatprep.subr.mxu0 0.0
  %87 = vmatpush1.msra.mxu0 0.0
  %88 = vmatprep.subr.mxu0 0.0
  %89 = vmatpush1.msra.mxu0 0.0
  %90 = vmatprep.subr.mxu0 0.0
  %91 = vmatpush1.msra.mxu0 0.0
  %92 = vmatprep.subr.mxu0 0.0
  %93 = vmatpush1.msra.mxu0 0.0
  %94 = vmatprep.subr.mxu0 0.0
  %95 = vmatpush1.msra.mxu0 0.0
  %96 = vmatprep.subr.mxu0 0.0
  %97 = vmatpush1.msra.mxu0 0.0
  %98 = vmatprep.subr.mxu0 0.0
  %99 = vmatpush1.msra.mxu0 0.0
  %100 = vmatprep.subr.mxu0 0.0
  %101 = vmatpush1.msra.mxu0 0.0
  %102 = vmatprep.subr.mxu0 0.0
  %103 = vmatpush1.msra.mxu0 0.0
  %104 = vmatprep.subr.mxu0 0.0
  %105 = vmatpush1.msra.mxu0 0.0
  %106 = vmatprep.subr.mxu0 0.0
  %107 = vmatpush1.msra.mxu0 0.0
  %108 = vmatprep.subr.mxu0 0.0
  %109 = vmatpush1.msra.mxu0 0.0
  %110 = vmatprep.subr.mxu0 0.0
  %111 = vmatpush1.msra.mxu0 0.0
  %112 = vmatprep.subr.mxu0 0.0
  %113 = vmatpush1.msra.mxu0 0.0
  %114 = vmatprep.subr.mxu0 0.0
  %115 = vmatpush1.msra.mxu0 0.0
  %116 = vmatprep.subr.mxu0 0.0
  %117 = vmatpush1.msra.mxu0 0.0
  %118 = vmatprep.subr.mxu0 0.0
  %119 = vmatpush1.msra.mxu0 0.0
  %120 = vmatprep.subr.mxu0 0.0
  %121 = vmatpush1.msra.mxu0 0.0
  %122 = vmatprep.subr.mxu0 0.0
  %123 = vmatpush1.msra.mxu0 0.0
  %124 = vmatprep.mubr.f32.mxu0 0.0
  %125 = vmatmul.mubr.f32.gmra.mrb[0].mxu0 %v33
  %v126 = vpop.f32.mrb[0].mxu0
  %v127 = vadd.f32 %v29, %v126
  %v128 = vpop.f32.mrb[0].mxu0
  %129 = vmatprep.mubr.f32.mxu0 0.0
  %130 = vmatmul.mubr.f32.gmra.mrb[0].mxu0 %v36
  %v131 = vpop.f32.mrb[0].mxu0
  %v132 = vadd.f32 %v29, %v131
  %v133 = vpop.f32.mrb[0].mxu0
  %134 = vmatprep.mubr.f32.mxu0 0.0
  %135 = vmatmul.mubr.f32.gmra.mrb[0].mxu0 %v39
  %v136 = vpop.f32.mrb[0].mxu0
  %v137 = vadd.f32 %v29, %v136
  %v138 = vpop.f32.mrb[0].mxu0
  %139 = vmatprep.mubr.f32.mxu0 0.0
  %140 = vmatmul.mubr.f32.gmra.mrb[0].mxu0 %v42
  %v141 = vpop.f32.mrb[0].mxu0
  %v142 = vadd.f32 %v29, %v141
  %v143 = vpop.f32.mrb[0].mxu0
  %144 = vmatprep.mubr.f32.mxu0 0.0
  %145 = vmatmul.mubr.f32.gmra.mrb[0].mxu0 %v45
  %v146 = vpop.f32.mrb[0].mxu0
  %v147 = vadd.f32 %v29, %v146
  %v148 = vpop.f32.mrb[0].mxu0
  %149 = vmatprep.mubr.f32.mxu0 0.0
  %150 = vmatmul.mubr.f32.gmra.mrb[0].mxu0 %v48
  %v151 = vpop.f32.mrb[0].mxu0
  %v152 = vadd.f32 %v29, %v151
  %v153 = vpop.f32.mrb[0].mxu0
  %154 = vmatprep.mubr.f32.mxu0 0.0
  %155 = vmatmul.mubr.f32.gmra.mrb[0].mxu0 %v51
  %v156 = vpop.f32.mrb[0].mxu0
  %v157 = vadd.f32 %v29, %v156
  %v158 = vpop.f32.mrb[0].mxu0
  %159 = vmatprep.mubr.f32.mxu0 0.0
  %160 = vmatmul.mubr.f32.gmra.mrb[0].mxu0 %v54
  %v161 = vpop.f32.mrb[0].mxu0
  %v162 = vadd.f32 %v29, %v161
  %v163 = vpop.f32.mrb[0].mxu0
  %164 = vdwg.mxu0
  %v165 = vmax.f32 %v127, 0.0
  %v166 = vmax.f32 %v132, 0.0
  %v167 = vmax.f32 %v137, 0.0
  %v168 = vmax.f32 %v142, 0.0
  %v169 = vmax.f32 %v147, 0.0
  %v170 = vmax.f32 %v152, 0.0
  %v171 = vmax.f32 %v157, 0.0
  %v172 = vmax.f32 %v162, 0.0
  %vm173 = vcmask 261120
  %174 = vst.msk [vmem:[%s3] sm:$0xff] %vm173, %v165
  %175 = vst.msk [vmem:[%s3 + $0x8] sm:$0xff] %vm173, %v166
  %176 = vst.msk [vmem:[%s3 + $0x10] sm:$0xff] %vm173, %v167
  %177 = vst.msk [vmem:[%s3 + $0x18] sm:$0xff] %vm173, %v168
  %178 = vst.msk [vmem:[%s3 + $0x20] sm:$0xff] %vm173, %v169
  %179 = vst.msk [vmem:[%s3 + $0x28] sm:$0xff] %vm173, %v170
  %180 = vst.msk [vmem:[%s3 + $0x30] sm:$0xff] %vm173, %v171
  %vm181 = vcmask 259072
  %182 = vst.msk [vmem:[%s3 + $0x38] sm:$0x3f] %vm181, %v172
  // Predicated region
  $region14: #{tpu_custom_call.1} parent=0 // pred_check
    _
  $region15: #{tpu_custom_call.1} parent=0 // pred_check_branch
    %184 = sbr.rel (0) target = $region17
  $region16: #{tpu_custom_call.1} parent=0 // pred_region
    _
  $region17: #{tpu_custom_call.1} parent=0 // pred_fallthru
    _
  // Predicated region
  $region18: #{tpu_custom_call.1} parent=0 // pred_check
    _
  $region19: #{tpu_custom_call.1} parent=0 // pred_check_branch
    %186 = sbr.rel (0) target = $region21
  $region20: #{tpu_custom_call.1} parent=0 // pred_region
    _
  $region21: #{tpu_custom_call.1} parent=0 // pred_fallthru
    _

</llo_original>
